<compile_context>
chip_gen: v6e
topology: v6e:2x2x1
jax: 0.10.0
libtpu: 0.0.40
codegen_flags: <defaults>
</compile_context>

<pallas_src>
import functools

import jax
import jax.numpy as jnp
from jax.experimental import pallas as pl
from jax.experimental.pallas import tpu as pltpu


_LANE_CANDIDATES = (1024, 512, 256, 128)  # widest lane-dense slab that avoids padding
_DEFAULT_LANES = 512

# Path A threshold: whole tensor (f32 working set) processed resident in VMEM.
_SINGLE_PASS_MAX_BYTES = 8 * 1024 * 1024
_SINGLE_PASS_VMEM_LIMIT = 48 * 1024 * 1024   # < 64 MiB physical on v7x

# Path B: ~4 MiB input blocks; pass 2 holds 2x(in+out) double-buffered blocks
# (~16 MiB) -> request a 32 MiB scoped VMEM limit (above v5e's 16 MiB default).
_TILED_BLOCK_BYTES = 4 * 1024 * 1024
_TILED_VMEM_LIMIT = 32 * 1024 * 1024


# --------------------------------------------------------------------------- #
# Kernels
# --------------------------------------------------------------------------- #
def _fused_quantize_kernel(x_ref, o_ref, *, scale):
    """Path A: whole tensor in VMEM -> reduce max(|tanh|) and quantize at once."""
    t = jnp.tanh(x_ref[...].astype(jnp.float32))
    # Fold the reference's `/ 2 / max(|t|)` and `* scale` into one multiply.
    # All-zero input gives inf/NaN exactly like the PyTorch divide-by-zero.
    c1 = (0.5 * scale) / jnp.max(jnp.abs(t))
    q = jnp.round(t * c1 + 0.5 * scale)
    o_ref[...] = (q * (2.0 / scale) - 1.0).astype(o_ref.dtype)


def _maxabs_kernel(x_ref, m_ref):
    """Path B pass 1: per-block max(|x|) partial, written as an (8,128) splat.

    Each grid step is independent ("parallel"), so on v7x both TensorCores
    stream HBM for the reduction; the final max over the tiny partial array is
    done in the wrapper.
    """
    tile_max = jnp.max(jnp.abs(x_ref[...].astype(jnp.float32)))
    m_ref[...] = jnp.full(m_ref.shape, tile_max, dtype=m_ref.dtype)


def _quantize_kernel(c1_ref, x_ref, o_ref, *, c2, c3):
    """Path B pass 2: out = round(tanh(x)*c1 + c2)*c3 - 1 (c1 scalar in SMEM)."""
    t = jnp.tanh(x_ref[...].astype(jnp.float32))
    q = jnp.round(t * c1_ref[0, 0] + c2)
    o_ref[...] = (q * c3 - 1.0).astype(o_ref.dtype)


# --------------------------------------------------------------------------- #
# Wrapper
# --------------------------------------------------------------------------- #
def weight_quantize(x, w_bits, _force_tiled=False):
    """Pallas implementation of weight_quantize.forward."""
    if w_bits == 32:
        return x
    assert w_bits != 1, "Binary quantization is not supported"

    scale = float(2 ** w_bits - 1)
    orig_shape = x.shape
    orig_dtype = x.dtype
    itemsize = x.dtype.itemsize

    flat = x.reshape(-1)
    n = flat.shape[0]

    # ---------------- Path A: single-pass, whole tensor in VMEM. ---------------- #
    if (not _force_tiled) and n * 4 <= _SINGLE_PASS_MAX_BYTES:
        lanes = None
        for cand in _LANE_CANDIDATES:
            if n % cand == 0:
                lanes = cand
                break
        if lanes is None:
            lanes = 128
            pad = (-n) % lanes
            flat = jnp.pad(flat, (0, pad))  # tensor fits VMEM: pad cost negligible
        else:
            pad = 0
        rows = flat.shape[0] // lanes
        x2d = flat.reshape(rows, lanes)     # whole-array block: no (8,128) constraint

        out2d = pl.pallas_call(
            functools.partial(_fused_quantize_kernel, scale=scale),
            out_shape=jax.ShapeDtypeStruct((rows, lanes), orig_dtype),
            compiler_params=pltpu.CompilerParams(
                vmem_limit_bytes=_SINGLE_PASS_VMEM_LIMIT),
            cost_estimate=pl.CostEstimate(
                flops=5 * n, transcendentals=n, bytes_accessed=2 * n * itemsize),
        )(x2d)

        if pad:
            return out2d.reshape(-1)[:n].reshape(orig_shape)
        return out2d.reshape(orig_shape)

    # ------------- Path B: large tensor, two tiled HBM-streaming passes. ------------- #
    lanes = _DEFAULT_LANES
    for cand in _LANE_CANDIDATES:
        if n % (8 * cand) == 0:
            lanes = cand
            break

    pad = (-n) % (8 * lanes)
    rows = (n + pad) // lanes

    # ~4 MiB input blocks (multiple of 8 rows); pad rows so the grid divides evenly
    # (zero padding never inflates max|x|).
    br_target = max(8, (_TILED_BLOCK_BYTES // (lanes * itemsize)) // 8 * 8)
    if rows <= br_target:
        br = rows
    else:
        br = br_target
        extra = (-rows) % br
        rows += extra
        pad += extra * lanes
    grid_rows = rows // br

    if pad:
        # TODO(synk): handle the ragged tail in-kernel (iota mask on the last
        # block) to avoid this full-tensor pad copy; rare for real weight shapes.
        flat = jnp.pad(flat, (0, pad))
    x2d = flat.reshape(rows, lanes)

    blk = pl.BlockSpec((br, lanes), lambda i: (i, 0))

    # ---- Pass 1: per-block max(|x|) partials, parallel across blocks / TCs. ----
    partials = pl.pallas_call(
        _maxabs_kernel,
        out_shape=jax.ShapeDtypeStruct((8 * grid_rows, 128), jnp.float32),
        grid=(grid_rows,),
        in_specs=[blk],
        out_specs=pl.BlockSpec((8, 128), lambda i: (i, 0)),
        compiler_params=pltpu.CompilerParams(
            dimension_semantics=("parallel",),
            vmem_limit_bytes=_TILED_VMEM_LIMIT),
        cost_estimate=pl.CostEstimate(
            flops=2 * n, transcendentals=0, bytes_accessed=n * itemsize),
    )(x2d)

    # tanh is odd & strictly monotone => max|tanh(x)| == tanh(max|x|); fold the
    # per-element divides into one scalar (all-zero input -> inf/NaN, matching
    # the PyTorch reference's divide-by-zero).
    maxabs = jnp.max(partials)
    c1 = ((0.5 * scale) / jnp.tanh(maxabs)).reshape(1, 1).astype(jnp.float32)
    c2 = 0.5 * scale
    c3 = 2.0 / scale

    # ---- Pass 2: tiled, double-buffered, parallel elementwise quantization. ----
    out2d = pl.pallas_call(
        functools.partial(_quantize_kernel, c2=c2, c3=c3),
        out_shape=jax.ShapeDtypeStruct((rows, lanes), orig_dtype),
        grid=(grid_rows,),
        in_specs=[pl.BlockSpec(memory_space=pltpu.MemorySpace.SMEM), blk],
        out_specs=blk,
        compiler_params=pltpu.CompilerParams(
            dimension_semantics=("parallel",),
            vmem_limit_bytes=_TILED_VMEM_LIMIT),
        cost_estimate=pl.CostEstimate(
            flops=4 * n, transcendentals=n, bytes_accessed=2 * n * itemsize),
    )(c1, x2d)

    if pad:
        return out2d.reshape(-1)[:n].reshape(orig_shape)
    return out2d.reshape(orig_shape)


# --------------------------------------------------------------------------- #
# Reference + self-test
# --------------------------------------------------------------------------- #
def _reference(x, w_bits):
    # Pure-JAX reference mirroring the PyTorch forward exactly.
    if w_bits == 32:
        return x
    t = jnp.tanh(x.astype(jnp.float32))
    out = t / 2.0 / jnp.max(jnp.abs(t)) + 0.5
    scale = float(2 ** w_bits - 1)
    out = jnp.round(out * scale) / scale
    return (2.0 * out - 1.0).astype(x.dtype)


if __name__ == "__main__":
    key = jax.random.PRNGKey(0)
    W_BITS = 4

    # Weight-like NCHW tensor, small shape consistent with a conv weight / input.
    x = jax.random.normal(key, (2, 4, 16, 16), dtype=jnp.float32)
    ref = _reference(x, W_BITS)

    # Path A: single-pass VMEM-resident kernel (default for this size).
    out = jax.block_until_ready(weight_quantize(x, W_BITS))
    assert out.shape == x.shape and out.dtype == x.dtype
    assert jnp.allclose(out, ref, atol=1e-5, rtol=1e-5)

    # Path B: exercise the tiled two-pass streaming path on the same small tensor.
    out_t = jax.block_until_ready(weight_quantize(x, W_BITS, _force_tiled=True))
    assert out_t.shape == x.shape and out_t.dtype == x.dtype
    assert jnp.allclose(out_t, ref, atol=1e-5, rtol=1e-5)

    print("KERNEL_OK")
</pallas_src>

<mosaic_0001>
module attributes {stable_mosaic.version = 11 : i64} {
  func.func @_fused_quantize_kernel(%arg0: memref<2x1024xf32, #tpu.memory_space<vmem>>, %arg1: memref<2x1024xf32, #tpu.memory_space<vmem>>) attributes {dimension_semantics = [], scalar_prefetch = 0 : i64, scratch_operands = 0 : i64, tpu.core_type = #tpu.core_type<tc>} {
    %c0 = arith.constant 0 : index
    %c0_0 = arith.constant 0 : index
    %0 = vector.load %arg0[%c0, %c0_0] : memref<2x1024xf32, #tpu.memory_space<vmem>>, vector<2x1024xf32>
    %1 = math.tanh %0 : vector<2x1024xf32>
    %2 = math.absf %1 : vector<2x1024xf32>
    %3 = vector.shape_cast %2 : vector<2x1024xf32> to vector<1x2x1024xf32>
    %cst = arith.constant dense<0xFF800000> : vector<1xf32>
    %4 = vector.multi_reduction <maximumf>, %3, %cst [1, 2] : vector<1x2x1024xf32> to vector<1xf32>
    %5 = vector.shape_cast %4 : vector<1xf32> to vector<1x1x1xf32>
    %6 = vector.extract %5[0, 0, 0] : f32 from vector<1x1x1xf32>
    %cst_1 = arith.constant 7.500000e+00 : f32
    %7 = arith.divf %cst_1, %6 : f32
    %8 = vector.broadcast %7 : f32 to vector<2x1024xf32>
    %9 = arith.mulf %1, %8 : vector<2x1024xf32>
    %cst_2 = arith.constant 7.500000e+00 : f32
    %10 = vector.broadcast %cst_2 : f32 to vector<2x1024xf32>
    %11 = arith.addf %9, %10 : vector<2x1024xf32>
    %12 = math.roundeven %11 : vector<2x1024xf32>
    %cst_3 = arith.constant 0.13333334 : f32
    %13 = vector.broadcast %cst_3 : f32 to vector<2x1024xf32>
    %14 = arith.mulf %12, %13 : vector<2x1024xf32>
    %cst_4 = arith.constant 1.000000e+00 : f32
    %15 = vector.broadcast %cst_4 : f32 to vector<2x1024xf32>
    %16 = arith.subf %14, %15 : vector<2x1024xf32>
    %c0_5 = arith.constant 0 : index
    %c0_6 = arith.constant 0 : index
    %17 = vector.load %arg1[%c0_5, %c0_6] : memref<2x1024xf32, #tpu.memory_space<vmem>>, vector<2x1024xf32>
    tpu.vector_store %arg1[%c0_5, %c0_6], %16 {strides = array<i32>} : memref<2x1024xf32, #tpu.memory_space<vmem>>, vector<2x1024xf32>,
    return
  }
}

</mosaic_0001>

<llo_original>
// kernel: tpu_custom_call.1
$region0: #{tpu_custom_call.1}
  #allocation0 [shape = 'u32[]', space=smem, size = 0x4, offset = 0x4, fixed_abs, tag = 'smem constant byte address 0x4 - core index']
  #allocation1 [shape = 'u32[144,128]{1,0:T(1,128)}', space=vmem, size = 0x12000, scoped, tag = 'internal scratch']
  %s0 = inlined_call_operand.hbm [shape: f32[2,1024], index: 0, kind: input, shape index: {}]
  %s1 = inlined_call_operand.hbm [shape: f32[2,1024], index: 1, kind: output, shape index: {}]
  %s2 = sld [smem:[#allocation0]]
  $region18: #{tpu_custom_call.1} parent=0
    _
  %s4 = ssub.s32 1, %s2
  %s5 = scalar_select 0, %s4, %s2
  $region1: #{tpu_custom_call.1} parent=0
    #allocation2 [shape = 'u8[8192]{0}', space=vmem, size = 0x2000, scoped, tag = 'input window, operand 0, single buffered']
    #allocation3 [shape = 's32[1]{0}', space=sflag, size = 0x4, scoped, tag = 'scoped memory for tpu_custom_call.1']
    #allocation4 [shape = 's32[1]{0}', space=sflag, size = 0x4, scoped, tag = 'scoped memory for tpu_custom_call.1']
    #allocation5 [shape = 'u8[8192]{0}', space=vmem, size = 0x2000, scoped, tag = 'output window, operand 0, single buffered']
    %6 = vsyncpa [#allocation3], 0
    %7 = vsyncpa [#allocation4], 0
    // Predicated region
    $region2: #{tpu_custom_call.1} parent=1 // pred_check
      _
    $region3: #{tpu_custom_call.1} parent=1 // pred_check_branch
      %9 = sbr.rel (0) target = $region5
    $region4: #{tpu_custom_call.1} parent=1 // pred_region
      %s11 = ssub.s32 256, 256
      %12 = vsyncadd [#allocation3], %s11
      %s14 = sshll.u32 [#allocation2], 4
      %s15 = int_to_ptr.vmem [resolvable:$true] %s14
      %17 = dma.hbm_to_vmem [thread:$0]  %s0, 256, %s15, [#allocation3]
    $region5: #{tpu_custom_call.1} parent=1 // pred_fallthru
      _
    // Predicated region
    $region6: #{tpu_custom_call.1} parent=1 // pred_check
      _
    $region7: #{tpu_custom_call.1} parent=1 // pred_check_branch
      %19 = sbr.rel (0) target = $region9
    $region8: #{tpu_custom_call.1} parent=1 // pred_region
      %20 = dma.done [#allocation3], 256
    $region9: #{tpu_custom_call.1} parent=1 // pred_fallthru
      _
    %v21 = vld [vmem:[#allocation2] sm:$0xff]
    %v22 = vld [vmem:[#allocation2 + $0x8] sm:$0xff]
    %v23 = vtanh.pop %v21
    %v24 = vtanh.pop %v22
    %v25 = vand.u32 2147483647, %v23
    %v26 = vand.u32 2147483647, %v24
    %v29 = vcombine.high %v25, %v25
    %v31 = vunpack.c.l.s4 1983009808
    %v32 = vunpack.c.0.s8 %v31
    %v33 = vlaneseq
    %v34 = vshrl.u32 %v33, 7
    %v35 = vsub.s32 %v32, %v34
    %v36 = vrot.slane %v25, %v35
    %v38 = vunpack.c.l.s4 1983009808
    %v39 = vunpack.c.0.s8 %v38
    %v40 = vlaneseq
    %v41 = vshrl.u32 %v40, 7
    %v42 = vsub.s32 %v39, %v41
    %v43 = vrot.slane %v29, %v42
    %v44 = vcombine.high %v36, %v36
    %v45 = vcombine.high %v43, %v43
    %v46 = vcombine.high %v26, %v26
    %v48 = vunpack.c.l.s4 1983009808
    %v49 = vunpack.c.0.s8 %v48
    %v50 = vlaneseq
    %v51 = vshrl.u32 %v50, 7
    %v52 = vsub.s32 %v49, %v51
    %v53 = vrot.slane %v26, %v52
    %v55 = vunpack.c.l.s4 1983009808
    %v56 = vunpack.c.0.s8 %v55
    %v57 = vlaneseq
    %v58 = vshrl.u32 %v57, 7
    %v59 = vsub.s32 %v56, %v58
    %v60 = vrot.slane %v46, %v59
    %v61 = vcombine.high %v53, %v53
    %v62 = vcombine.high %v60, %v60
    %vm71 = vcmask 1041408
    %v72 = vsel %vm71, %v36, -inf
    %v73 = vsel %vm71, %v44, -inf
    %v74 = vsel %vm71, %v43, -inf
    %v75 = vsel %vm71, %v45, -inf
    %v76 = vsel %vm71, %v53, -inf
    %v77 = vmax.f32 %v72, %v76
    %v78 = vsel %vm71, %v61, -inf
    %v79 = vmax.f32 %v73, %v78
    %v80 = vsel %vm71, %v60, -inf
    %v81 = vmax.f32 %v74, %v80
    %v82 = vsel %vm71, %v62, -inf
    %v83 = vmax.f32 %v75, %v82
    %v84 = vmax.f32 %v77, %v79
    %v85 = vmax.f32 %v81, %v83
    %v86 = vmax.f32 %v84, %v85
    %87 = vmax.xlane.f32.xlu0 %v86
    %v88 = vpop.xlane.xlu0 %87
    %v89 = vrot.slane %v88, 4
    %v90 = vmax.f32 %v88, %v89
    %v91 = vrot.slane %v90, 2
    %v92 = vmax.f32 %v90, %v91
    %v93 = vrot.slane %v92, 1
    %v94 = vmax.f32 %v92, %v93
    %s95 = vtos %v94
    %v96 = vstv %s95
    %v97 = vrcp.pop %v96
    %s98 = vtos %v97
    %s99 = smul.f32 7.5, %s98
    %v100 = vstv %s99
    %v101 = vmul.f32 %v23, %v100
    %v102 = vmul.f32 %v24, %v100
    %v103 = vadd.f32 %v101, 7.5
    %v104 = vadd.f32 %v102, 7.5
    %v105 = vround.ne.pseudo %v103
    %v106 = vround.ne.pseudo %v104
    %v107 = vmul.f32 %v105, 0.13333334
    %v108 = vmul.f32 %v106, 0.13333334
    %v109 = vsub.f32 %v107, 1.0
    %v110 = vsub.f32 %v108, 1.0
    %111 = vst [vmem:[#allocation5] sm:$0xff] %v109
    %112 = vst [vmem:[#allocation5 + $0x8] sm:$0xff] %v110
    // Predicated region
    $region10: #{tpu_custom_call.1} parent=1 // pred_check
      _
    $region11: #{tpu_custom_call.1} parent=1 // pred_check_branch
      %114 = sbr.rel (0) target = $region13
    $region12: #{tpu_custom_call.1} parent=1 // pred_region
      %s116 = ssub.s32 256, 256
      %117 = vsyncadd [#allocation4], %s116
      %s119 = sshll.u32 [#allocation5], 4
      %s120 = int_to_ptr.vmem [resolvable:$true] %s119
      %122 = dma.vmem_to_hbm [thread:$0]  %s120, 256, %s1, [#allocation4]
    $region13: #{tpu_custom_call.1} parent=1 // pred_fallthru
      _
    // Predicated region
    $region14: #{tpu_custom_call.1} parent=1 // pred_check
      _
    $region15: #{tpu_custom_call.1} parent=1 // pred_check_branch
      %124 = sbr.rel (0) target = $region17
    $region16: #{tpu_custom_call.1} parent=1 // pred_region
      %125 = dma.done [#allocation4], 256
    $region17: #{tpu_custom_call.1} parent=1 // pred_fallthru
      _
    %126 = vsyncpa [#allocation3], 1
    %127 = vsyncpa [#allocation4], 1

</llo_original>
